<compile_context>
chip_gen: v7x
topology: tpu7x:2x2x1
jax: 0.10.0
libtpu: 0.0.40
codegen_flags: <defaults>
</compile_context>

<pallas_src>
import jax
import jax.numpy as jnp
from jax.experimental import pallas as pl
from jax.experimental.pallas import tpu as pltpu


# ----------------------------------------------------------------------------
# Deterministic "module __init__" parameter construction (buffers, not weights)
# ----------------------------------------------------------------------------
def make_sp_buffers(n_features: int, n_instances: int,
                    importance: str = "decay", probability: str = "inverted"):
    if importance == "decay":
        imp = 0.9 ** jnp.arange(n_features, dtype=jnp.float32)
    elif importance == "constant":
        imp = jnp.ones((n_features,), dtype=jnp.float32)
    else:
        raise ValueError(importance)

    if probability == "inverted":
        prob = 50.0 ** jnp.linspace(0.0, -1.0, n_instances, dtype=jnp.float32)
    elif probability == "constant":
        prob = jnp.ones((n_instances,), dtype=jnp.float32)
    else:
        raise ValueError(probability)

    return imp[None, :], prob[:, None]  # (1, F), (I, 1)


# ----------------------------------------------------------------------------
# Pallas kernel: importance-weighted MSE criterion
# ----------------------------------------------------------------------------
def _criterion_kernel(imp_ref, yhat_ref, y_ref, out_ref, acc_ref):
    b = pl.program_id(0)

    @pl.when(b == 0)
    def _():
        acc_ref[...] = jnp.zeros_like(acc_ref)

    # Pure VPU work per step: subtract, square, scale, elementwise accumulate.
    diff = y_ref[...] - yhat_ref[...]               # (TB, D)
    acc_ref[...] += imp_ref[...] * (diff * diff)    # imp (1, D) broadcast over sublanes

    # Single cross-lane/sublane reduce, only on the last grid step.
    @pl.when(b == pl.num_programs(0) - 1)
    def _():
        out_ref[...] = jnp.sum(acc_ref[...]).reshape(1, 1)


def _pick_batch_tile(B: int, D: int, elem_bytes: int = 4,
                     tile_budget_bytes: int = 2 << 20) -> int:
    """Largest batch tile: full B if it fits the per-tile budget, else a
    multiple of 8 that divides B (keeps the (8,128) block constraint happy
    and leaves room for double-buffering inside the scoped VMEM limit)."""
    if B * D * elem_bytes <= tile_budget_bytes:
        return B
    max_rows = tile_budget_bytes // (D * elem_bytes)
    tb = (max_rows // 8) * 8
    while tb >= 8:
        if B % tb == 0:
            return tb
        tb -= 8
    return B  # fallback: single full-batch block


def sp_criterion(importance: jax.Array, y_hat: jax.Array, y: jax.Array) -> jax.Array:
    """loss = sum over instances of mean over (batch, features) of importance*(y-y_hat)^2."""
    B, I, F = y.shape
    assert y_hat.shape == (B, I, F)
    assert importance.shape == (1, F)
    D = I * F

    # Wrapper-side (one-time) layout + constant folding:
    #  - flatten (I, F) -> D so the kernel last dim is lane-dense,
    #  - tile importance across instances and fold in 1/(B*F).
    scale = 1.0 / float(B * F)
    imp_flat = jnp.tile(importance.astype(jnp.float32), (1, I)) * scale   # (1, D)
    yhat2 = y_hat.reshape(B, D).astype(jnp.float32)
    y2 = y.reshape(B, D).astype(jnp.float32)

    tb = _pick_batch_tile(B, D)
    grid = (B // tb,)

    out = pl.pallas_call(
        _criterion_kernel,
        out_shape=jax.ShapeDtypeStruct((1, 1), jnp.float32),
        grid_spec=pltpu.PrefetchScalarGridSpec(
            num_scalar_prefetch=0,
            grid=grid,
            in_specs=[
                pl.BlockSpec((1, D), lambda b: (0, 0)),     # importance (resident)
                pl.BlockSpec((tb, D), lambda b: (b, 0)),    # y_hat tile
                pl.BlockSpec((tb, D), lambda b: (b, 0)),    # y tile
            ],
            out_specs=pl.BlockSpec((1, 1), lambda b: (0, 0)),  # resident scalar output
            scratch_shapes=[pltpu.VMEM((tb, D), jnp.float32)],  # vector accumulator
        ),
        compiler_params=pltpu.CompilerParams(
            dimension_semantics=("arbitrary",),   # batch axis is a reduction
            vmem_limit_bytes=32 << 20,            # safe on v5e/v6e/v7x scoped VMEM
        ),
    )(imp_flat, yhat2, y2)
    return out[0, 0]


# ----------------------------------------------------------------------------
# Plain-JAX glue mirroring generate_batch() (used only to build demo inputs)
# ----------------------------------------------------------------------------
def generate_batch(key, batch_size, n_instances, n_features, probability, feature_scale=1.0):
    k1, k2 = jax.random.split(key)
    dims = (batch_size, n_instances, n_features)
    features = jax.random.uniform(k1, dims, dtype=jnp.float32) * feature_scale
    mask = jax.random.uniform(k2, dims, dtype=jnp.float32) < probability[None, :, :]  # prob (I,1)
    return features * mask


if __name__ == "__main__":
    # Small config consistent with the module: batch=4, n_instances=8, n_features=32
    B, I, F = 4, 8, 32
    importance, probability = make_sp_buffers(F, I, "decay", "inverted")

    key = jax.random.PRNGKey(0)
    k_batch, k_noise = jax.random.split(key)
    y = generate_batch(k_batch, B, I, F, probability, feature_scale=1.0)
    # A stand-in reconstruction y_hat (the base class forward is abstract).
    y_hat = y + 0.05 * jax.random.normal(k_noise, y.shape, dtype=jnp.float32)

    loss = sp_criterion(importance, y_hat, y)
    loss = jax.block_until_ready(loss)

    # Pure-JAX reference of criterion()
    err_ref = importance[None, :, :] * (y - y_hat) ** 2          # (B, I, F), imp (1,1,F)
    ref = jnp.sum(jnp.mean(err_ref, axis=(0, 2)))                # reduce 'b i f -> i' mean, then sum
    assert jnp.allclose(loss, ref, rtol=1e-5, atol=1e-6), (loss, ref)

    print("KERNEL_OK")
</pallas_src>

<mosaic_0001>
module attributes {stable_mosaic.version = 11 : i64} {
  func.func @_criterion_kernel(%arg0: i32, %arg1: memref<1x256xf32, #tpu.memory_space<vmem>>, %arg2: memref<4x256xf32, #tpu.memory_space<vmem>>, %arg3: memref<4x256xf32, #tpu.memory_space<vmem>>, %arg4: memref<1x1xf32, #tpu.memory_space<vmem>>, %arg5: memref<4x256xf32, #tpu.memory_space<vmem>>) attributes {dimension_semantics = [#tpu.dimension_semantics<arbitrary>], iteration_bounds = array<i64: 1>, scalar_prefetch = 0 : i64, scratch_operands = 1 : i64, tpu.core_type = #tpu.core_type<tc>, window_params = [{pipeline_mode = #tpu.pipeline_mode<synchronous>, transform_indices = @transform_0, window_bounds = array<i64: 1, 256>}, {transform_indices = @transform_1, window_bounds = array<i64: 4, 256>}, {transform_indices = @transform_2, window_bounds = array<i64: 4, 256>}, {pipeline_mode = #tpu.pipeline_mode<synchronous>, transform_indices = @transform_3, window_bounds = array<i64: 1, 1>}]} {
    %c0_i32 = arith.constant 0 : i32
    %0 = arith.cmpi eq, %arg0, %c0_i32 : i32
    %1 = arith.extui %0 : i1 to i32
    %c0_i32_0 = arith.constant 0 : i32
    %2 = arith.cmpi ne, %1, %c0_i32_0 : i32
    scf.if %2 {
      %cst = arith.constant 0.000000e+00 : f32
      %16 = vector.broadcast %cst : f32 to vector<4x256xf32>
      %c0_12 = arith.constant 0 : index
      %c0_13 = arith.constant 0 : index
      %17 = vector.load %arg5[%c0_12, %c0_13] : memref<4x256xf32, #tpu.memory_space<vmem>>, vector<4x256xf32>
      tpu.vector_store %arg5[%c0_12, %c0_13], %16 {strides = array<i32>} : memref<4x256xf32, #tpu.memory_space<vmem>>, vector<4x256xf32>,
    } else {
    }
    %c0 = arith.constant 0 : index
    %c0_1 = arith.constant 0 : index
    %3 = vector.load %arg3[%c0, %c0_1] : memref<4x256xf32, #tpu.memory_space<vmem>>, vector<4x256xf32>
    %c0_2 = arith.constant 0 : index
    %c0_3 = arith.constant 0 : index
    %4 = vector.load %arg2[%c0_2, %c0_3] : memref<4x256xf32, #tpu.memory_space<vmem>>, vector<4x256xf32>
    %5 = arith.subf %3, %4 : vector<4x256xf32>
    %c0_4 = arith.constant 0 : index
    %c0_5 = arith.constant 0 : index
    %6 = vector.load %arg5[%c0_4, %c0_5] : memref<4x256xf32, #tpu.memory_space<vmem>>, vector<4x256xf32>
    %c0_6 = arith.constant 0 : index
    %c0_7 = arith.constant 0 : index
    %7 = vector.load %arg1[%c0_6, %c0_7] : memref<1x256xf32, #tpu.memory_space<vmem>>, vector<1x256xf32>
    %8 = arith.mulf %5, %5 : vector<4x256xf32>
    %9 = vector.broadcast %7 : vector<1x256xf32> to vector<4x256xf32>
    %10 = arith.mulf %9, %8 : vector<4x256xf32>
    %11 = arith.addf %6, %10 : vector<4x256xf32>
    %c0_8 = arith.constant 0 : index
    %c0_9 = arith.constant 0 : index
    %12 = vector.load %arg5[%c0_8, %c0_9] : memref<4x256xf32, #tpu.memory_space<vmem>>, vector<4x256xf32>
    tpu.vector_store %arg5[%c0_8, %c0_9], %11 {strides = array<i32>} : memref<4x256xf32, #tpu.memory_space<vmem>>, vector<4x256xf32>,
    %c0_i32_10 = arith.constant 0 : i32
    %13 = arith.cmpi eq, %arg0, %c0_i32_10 : i32
    %14 = arith.extui %13 : i1 to i32
    %c0_i32_11 = arith.constant 0 : i32
    %15 = arith.cmpi ne, %14, %c0_i32_11 : i32
    scf.if %15 {
      %c0_12 = arith.constant 0 : index
      %c0_13 = arith.constant 0 : index
      %16 = vector.load %arg5[%c0_12, %c0_13] : memref<4x256xf32, #tpu.memory_space<vmem>>, vector<4x256xf32>
      %17 = vector.shape_cast %16 : vector<4x256xf32> to vector<1x4x256xf32>
      %cst = arith.constant dense<0.000000e+00> : vector<1xf32>
      %18 = vector.multi_reduction <add>, %17, %cst [1, 2] : vector<1x4x256xf32> to vector<1xf32>
      %19 = vector.shape_cast %18 : vector<1xf32> to vector<1x1x1xf32>
      %20 = vector.extract %19[0, 0, 0] : f32 from vector<1x1x1xf32>
      %21 = vector.broadcast %20 : f32 to vector<1x1xf32>
      %c0_14 = arith.constant 0 : index
      %c0_15 = arith.constant 0 : index
      %22 = vector.load %arg4[%c0_14, %c0_15] : memref<1x1xf32, #tpu.memory_space<vmem>>, vector<1x1xf32>
      tpu.vector_store %arg4[%c0_14, %c0_15], %21 {strides = array<i32>} : memref<1x1xf32, #tpu.memory_space<vmem>>, vector<1x1xf32>,
    } else {
    }
    return
  }
  func.func @transform_0(%arg0: i32) -> (i32, i32) {
    %c0_i32 = arith.constant 0 : i32
    %c0_i32_0 = arith.constant 0 : i32
    %c0_i32_1 = arith.constant 0 : i32
    return %c0_i32, %c0_i32_0 : i32, i32
  }
  func.func @transform_1(%arg0: i32) -> (i32, i32) {
    %c0_i32 = arith.constant 0 : i32
    %c0_i32_0 = arith.constant 0 : i32
    return %arg0, %c0_i32 : i32, i32
  }
  func.func @transform_2(%arg0: i32) -> (i32, i32) {
    %c0_i32 = arith.constant 0 : i32
    %c0_i32_0 = arith.constant 0 : i32
    return %arg0, %c0_i32 : i32, i32
  }
  func.func @transform_3(%arg0: i32) -> (i32, i32) {
    %c0_i32 = arith.constant 0 : i32
    %c0_i32_0 = arith.constant 0 : i32
    %c0_i32_1 = arith.constant 0 : i32
    return %c0_i32, %c0_i32_0 : i32, i32
  }
}

</mosaic_0001>

<llo_original>
// kernel: tpu_custom_call.1
$region0: #{tpu_custom_call.1}
  #allocation0 [shape = 'u32[]', space=smem, size = 0x4, offset = 0x4, fixed_abs, tag = 'smem constant byte address 0x4 - core index']
  #allocation1 [shape = 'u32[144,128]{1,0:T(1,128)}', space=vmem, size = 0x12000, scoped, tag = 'internal scratch']
  #allocation2 [shape = 'f32[4,256]{1,0:T(4,128)}', space=vmem, size = 0x1000, scoped, tag = 'scratch operand']
  %s0 = inlined_call_operand.hbm [shape: f32[1,256], index: 0, kind: input, shape index: {}]
  %s1 = inlined_call_operand.hbm [shape: f32[4,256], index: 1, kind: input, shape index: {}]
  %s2 = inlined_call_operand.hbm [shape: f32[4,256], index: 2, kind: input, shape index: {}]
  %s3 = inlined_call_operand.hbm [shape: f32[1,1], index: 3, kind: output, shape index: {}]
  %s4 = sld [smem:[#allocation0]]
  $region42: #{tpu_custom_call.1} parent=0
    _
  %s6 = ssub.s32 1, %s4
  %s7 = scalar_select 0, %s6, %s4
  $region1: #{tpu_custom_call.1} parent=0
    #allocation3 [shape = 'u8[1024]{0}', space=vmem, size = 0x400, scoped, tag = 'input window, operand 0, single buffered']
    #allocation4 [shape = 's32[1]{0}', space=sflag, size = 0x4, scoped, tag = 'scoped memory for tpu_custom_call.1']
    #allocation5 [shape = 's32[1]{0}', space=sflag, size = 0x4, scoped, tag = 'scoped memory for tpu_custom_call.1']
    #allocation6 [shape = 'u8[4096]{0}', space=vmem, size = 0x1000, scoped, tag = 'input window, operand 1, single buffered']
    #allocation7 [shape = 's32[1]{0}', space=sflag, size = 0x4, scoped, tag = 'scoped memory for tpu_custom_call.1']
    #allocation8 [shape = 'u8[4096]{0}', space=vmem, size = 0x1000, scoped, tag = 'input window, operand 2, single buffered']
    #allocation9 [shape = 'u8[512]{0}', space=vmem, size = 0x400, scoped, tag = 'output window, operand 0, single buffered']
    %8 = vsyncpa [#allocation4], 0
    %9 = vsyncpa [#allocation7], 0
    %10 = vsyncpa [#allocation5], 0
    // Predicated region
    $region2: #{tpu_custom_call.1} parent=1 // pred_check
      _
    $region3: #{tpu_custom_call.1} parent=1 // pred_check_branch
      %12 = sbr.rel (0) target = $region5
    $region4: #{tpu_custom_call.1} parent=1 // pred_region
      %s14 = ssub.s32 32, 32
      %15 = vsyncadd [#allocation4], %s14
      %s17 = sshll.u32 [#allocation3], 4
      %s18 = int_to_ptr.vmem [resolvable:$true] %s17
      %20 = dma.hbm_to_vmem [thread:$0]  %s0, 32, %s18, [#allocation4]
    $region5: #{tpu_custom_call.1} parent=1 // pred_fallthru
      _
    // Predicated region
    $region6: #{tpu_custom_call.1} parent=1 // pred_check
      _
    $region7: #{tpu_custom_call.1} parent=1 // pred_check_branch
      %22 = sbr.rel (0) target = $region9
    $region8: #{tpu_custom_call.1} parent=1 // pred_region
      %s24 = ssub.s32 128, 128
      %25 = vsyncadd [#allocation7], %s24
      %s27 = sshll.u32 [#allocation6], 4
      %s28 = int_to_ptr.vmem [resolvable:$true] %s27
      %30 = dma.hbm_to_vmem [thread:$0]  %s1, 128, %s28, [#allocation7]
    $region9: #{tpu_custom_call.1} parent=1 // pred_fallthru
      _
    // Predicated region
    $region10: #{tpu_custom_call.1} parent=1 // pred_check
      _
    $region11: #{tpu_custom_call.1} parent=1 // pred_check_branch
      %32 = sbr.rel (0) target = $region13
    $region12: #{tpu_custom_call.1} parent=1 // pred_region
      %s34 = ssub.s32 128, 128
      %35 = vsyncadd [#allocation7], %s34
      %s37 = sshll.u32 [#allocation8], 4
      %s38 = int_to_ptr.vmem [resolvable:$true] %s37
      %40 = dma.hbm_to_vmem [thread:$0]  %s2, 128, %s38, [#allocation7]
    $region13: #{tpu_custom_call.1} parent=1 // pred_fallthru
      _
    // Predicated region
    $region14: #{tpu_custom_call.1} parent=1 // pred_check
      _
    $region15: #{tpu_custom_call.1} parent=1 // pred_check_branch
      %42 = sbr.rel (0) target = $region17
    $region16: #{tpu_custom_call.1} parent=1 // pred_region
      %43 = dma.done [#allocation4], 32
    $region17: #{tpu_custom_call.1} parent=1 // pred_fallthru
      _
    // Predicated region
    $region18: #{tpu_custom_call.1} parent=1 // pred_check
      _
    $region19: #{tpu_custom_call.1} parent=1 // pred_check_branch
      %45 = sbr.rel (0) target = $region21
    $region20: #{tpu_custom_call.1} parent=1 // pred_region
      %46 = dma.done [#allocation7], 128
    $region21: #{tpu_custom_call.1} parent=1 // pred_fallthru
      _
    // Predicated region
    $region22: #{tpu_custom_call.1} parent=1 // pred_check
      _
    $region23: #{tpu_custom_call.1} parent=1 // pred_check_branch
      %48 = sbr.rel (0) target = $region25
    $region24: #{tpu_custom_call.1} parent=1 // pred_region
      %49 = dma.done [#allocation7], 128
    $region25: #{tpu_custom_call.1} parent=1 // pred_fallthru
      _
    %p50 = scmp.eq.s32.totalorder 0, 0
    // Predicated region
    $region26: #{tpu_custom_call.1} parent=1 // pred_check
      %p51 = pneg %p50
    $region27: #{tpu_custom_call.1} parent=1 // pred_check_branch
      %53 = sbr.rel (%p51) target = $region29
    $region28: #{tpu_custom_call.1} parent=1 // pred_region
      %54 = vst [vmem:[#allocation2] sm:$0xff] 0.0
    $region29: #{tpu_custom_call.1} parent=1 // pred_fallthru
      _
    %v55 = vld [vmem:[#allocation8] sm:$0xff]
    %v56 = vld [vmem:[#allocation6] sm:$0xff]
    %v57 = vsub.f32 %v55, %v56
    %v58 = vld [vmem:[#allocation2] sm:$0xff]
    %v59 = vld [vmem:[#allocation3] sm:$0x3]
    %v60 = vmul.f32 %v57, %v57
    %v62 = vlaneseq
    %v63 = vshrl.u32 %v62, 7
    %v64 = vsub.s32 0, %v63
    %v65 = vrot.slane %v59, %v64
    %v66 = vlaneseq
    %v67 = vshrl.u32 %v66, 7
    %v68 = vsub.s32 1, %v67
    %v69 = vrot.slane %v59, %v68
    %v73 = vcombine.high %v60, %v60
    %v75 = vmul.f32 %v65, %v60
    %v76 = vmul.f32 %v69, %v73
    %v79 = vcombine.low %v75, %v76
    %v81 = vadd.f32 %v58, %v79
    %82 = vst [vmem:[#allocation2] sm:$0xff] %v81
    // Predicated region
    $region30: #{tpu_custom_call.1} parent=1 // pred_check
      %p83 = pneg %p50
    $region31: #{tpu_custom_call.1} parent=1 // pred_check_branch
      %85 = sbr.rel (%p83) target = $region33
    $region32: #{tpu_custom_call.1} parent=1 // pred_region
      %v86 = vld [vmem:[#allocation2] sm:$0xff]
      %v88 = vcombine.high %v86, %v86
      %vm90 = vcmask 1043456
      %v91 = vsel %vm90, %v86, 0.0
      %v92 = vsel %vm90, %v88, 0.0
      %v93 = vadd.f32 %v91, %v92
      %94 = vadd.xlane.f32.xlu0 %v93
      %v95 = vpop.xlane.xlu0 %94
      %v96 = vrot.slane %v95, 4
      %v97 = vadd.f32 %v95, %v96
      %v98 = vrot.slane %v97, 2
      %v99 = vadd.f32 %v97, %v98
      %v100 = vrot.slane %v99, 1
      %v101 = vadd.f32 %v99, %v100
      %s102 = vtos %v101
      %v103 = vstv %s102
      %vm104 = vcmask 0
      %105 = vst.msk [vmem:[#allocation9] sm:$0x1] %vm104, %v103
    $region33: #{tpu_custom_call.1} parent=1 // pred_fallthru
      _
    // Predicated region
    $region34: #{tpu_custom_call.1} parent=1 // pred_check
      _
    $region35: #{tpu_custom_call.1} parent=1 // pred_check_branch
      %107 = sbr.rel (0) target = $region37
    $region36: #{tpu_custom_call.1} parent=1 // pred_region
      %s109 = ssub.s32 16, 16
      %110 = vsyncadd [#allocation5], %s109
      %s112 = sshll.u32 [#allocation9], 4
      %s113 = int_to_ptr.vmem [resolvable:$true] %s112
      %115 = dma.vmem_to_hbm [thread:$0]  %s113, 16, %s3, [#allocation5]
    $region37: #{tpu_custom_call.1} parent=1 // pred_fallthru
      _
    // Predicated region
    $region38: #{tpu_custom_call.1} parent=1 // pred_check
      _
    $region39: #{tpu_custom_call.1} parent=1 // pred_check_branch
      %117 = sbr.rel (0) target = $region41
    $region40: #{tpu_custom_call.1} parent=1 // pred_region
      %118 = dma.done [#allocation5], 16
    $region41: #{tpu_custom_call.1} parent=1 // pred_fallthru
      _
    %119 = vsyncpa [#allocation4], 1
    %120 = vsyncpa [#allocation7], 1
    %121 = vsyncpa [#allocation5], 1

</llo_original>
